<compile_context>
chip_gen: v7x
topology: tpu7x:2x2x1
jax: 0.10.0
libtpu: 0.0.40
codegen_flags: <defaults>
</compile_context>

<pallas_src>
import jax
import jax.numpy as jnp
from jax.experimental import pallas as pl
from jax.experimental.pallas import tpu as pltpu


# ----------------------------------------------------------------------------
# Kernel body
# ----------------------------------------------------------------------------
def _ea_kernel(q_ref, wk_ref, wv_ref, o_ref):
    # q_ref: (Bb, N, D); wk_ref: (D, S); wv_ref: (S, Dp); o_ref: (Bb, N, Dp)
    Bb, N, D = q_ref.shape
    S = wk_ref.shape[1]
    Dp = o_ref.shape[2]

    # ---- mk: scores = q @ Wk^T, as one (Bb*N, D) @ (D, S) MXU matmul --------
    # Operands stay in their native dtype (bf16 hits the native MXU path);
    # accumulation is f32 via preferred_element_type.
    q2 = q_ref[...].reshape(Bb * N, D)
    scores = jnp.dot(q2, wk_ref[...],
                     preferred_element_type=jnp.float32)      # (Bb*N, S)
    scores = scores.reshape(Bb, N, S)

    # ---- softmax over the token axis (dim=1), per batch & per S column ------
    m = jnp.max(scores, axis=1, keepdims=True)                # (Bb, 1, S)
    e = jnp.exp(scores - m)
    colsum = jnp.sum(e, axis=1, keepdims=True)                # (Bb, 1, S)
    # Exact reciprocal here: its error would otherwise propagate through the
    # second matmul. Only Bb*S elements, essentially free.
    p = e * pl.reciprocal(colsum, approx=False)               # softmax probs

    # ---- dim=2 renormalization, deferred past the second matmul (exact) -----
    rowsum = jnp.sum(p, axis=2, keepdims=True)                # (Bb, N, 1)

    # ---- mv: out = (p / rowsum) @ Wv^T == (p @ Wv^T) / rowsum ----------------
    p2 = p.astype(wv_ref.dtype).reshape(Bb * N, S)
    out = jnp.dot(p2, wv_ref[...],
                  preferred_element_type=jnp.float32)         # (Bb*N, Dp)
    out = out.reshape(Bb, N, Dp) * pl.reciprocal(rowsum, approx=True)
    o_ref[...] = out.astype(o_ref.dtype)


# ----------------------------------------------------------------------------
# Sizing helpers
# ----------------------------------------------------------------------------
def _round_up(x, m):
    return ((x + m - 1) // m) * m


def _tpu_vmem_and_cores():
    """(physical VMEM bytes per TensorCore, number of TensorCores per device)."""
    vmem_cap = 128 * 1024 * 1024          # v5e / v6e default
    num_tc = 1
    try:
        kind = jax.devices()[0].device_kind.lower()
    except Exception:  # pragma: no cover - be robust on exotic runtimes
        kind = ""
    if "v7" in kind:
        vmem_cap = 64 * 1024 * 1024       # 64 MiB per TensorCore on v7x
        num_tc = 2
    elif ("v4" in kind) or ("v5p" in kind) or ("v5 p" in kind):
        num_tc = 2                        # megacore chips
    try:
        info = pltpu.get_tpu_info()
        cap = int(getattr(info, "vmem_capacity_bytes", 0))
        if cap > 0:
            vmem_cap = min(cap, vmem_cap) if "v7" in kind else cap
    except Exception:
        pass
    return vmem_cap, num_tc


def _block_bytes(Bb, N, D, S, Dp, itemsize, weight_bufs):
    """Approximate VMEM residency of one grid step."""
    q = 2 * Bb * N * D * itemsize                      # double-buffered input block
    o = 2 * Bb * N * Dp * itemsize                     # double-buffered output block
    w = weight_bufs * (D * S + S * Dp) * itemsize      # weight blocks (grid-invariant)
    # f32 scores/exp/probs temporaries + cast probs + f32 output temp
    tmp = 3 * Bb * N * S * 4 + Bb * N * S * itemsize + Bb * N * Dp * 4
    return q + o + w + tmp


def _pick_batch_block(B, N, D, S, Dp, itemsize, vmem_budget, num_tc):
    """How many batches to fold into one grid step."""
    # Dtype-aware sublane packing: the in-kernel (Bb*N, .) flatten is only a
    # free relayout when N is a multiple of the packed sublane count.
    pack = 8 * max(1, 4 // max(1, itemsize))           # 8 f32 / 16 bf16 / 32 int8
    if N % pack != 0:
        return 1

    # Fill the MXU M dimension; with the bigger v5e/v6e VMEM budget aim higher.
    target_rows = 1024 if vmem_budget >= 64 * 1024 * 1024 else 512
    bb = min(B, max(1, pl.cdiv(target_rows, N)))

    # Stay inside the per-core VMEM budget (weights counted once: single-buffered).
    while bb > 1 and _block_bytes(bb, N, D, S, Dp, itemsize, weight_bufs=1) > vmem_budget:
        bb -= 1

    # Only multi-TensorCore chips need >= num_tc grid steps; on single-TC chips
    # the grid is a serial loop and splitting it only adds overhead.
    if num_tc > 1 and B >= num_tc:
        bb = min(bb, pl.cdiv(B, num_tc))

    # Prefer a nearby exact divisor of B (no padded work); otherwise keep bb and
    # let the wrapper pad B — never collapse to Bb=1 for awkward/prime B.
    if B % bb:
        for cand in range(bb, max(1, bb // 2) - 1, -1):
            if B % cand == 0:
                return cand
    return bb


# ----------------------------------------------------------------------------
# Wrapper
# ----------------------------------------------------------------------------
def single_head_external_attention(queries, wk_t, wv_t, *, compute_dtype=None):
    """queries: (B, N, D); wk_t: (D, S) == mk.weight.T; wv_t: (S, D) == mv.weight.T.

    compute_dtype: optionally cast I/O (e.g. jnp.bfloat16) — MXU accumulation and
    softmax math stay in f32; default keeps the caller's dtype/semantics.
    """
    B, N, D = queries.shape
    S = wk_t.shape[1]

    if compute_dtype is not None:
        queries = queries.astype(compute_dtype)
        wk_t = wk_t.astype(compute_dtype)
        wv_t = wv_t.astype(compute_dtype)
    out_dtype = queries.dtype

    # Lane-dense output store: pad Wv's output columns (kernel output last dim)
    # to a multiple of 128 so the final store is an unmasked vst.
    Dp = D if D % 128 == 0 else _round_up(D, 128)
    if Dp != D:
        wv_t = jnp.pad(wv_t, ((0, 0), (0, Dp - D)))

    itemsize = jnp.dtype(queries.dtype).itemsize
    vmem_cap, num_tc = _tpu_vmem_and_cores()
    vmem_budget = (3 * vmem_cap) // 4                   # ~0.75x physical VMEM
    Bb = _pick_batch_block(B, N, D, S, Dp, itemsize, vmem_budget, num_tc)

    # Pad B up to a multiple of Bb instead of shrinking Bb to a divisor.
    Bp = _round_up(B, Bb)
    if Bp != B:
        queries = jnp.pad(queries, ((0, Bp - B), (0, 0), (0, 0)))

    # ~1.25x actual residency (computed with double-buffered weights so the
    # fallback path below also fits), clamped to physical VMEM.
    vmem_limit = int(min(
        vmem_cap,
        max(32 * 1024 * 1024,
            int(1.25 * _block_bytes(Bb, N, D, S, Dp, itemsize, weight_bufs=2)))))

    def build(single_buffer_weights):
        if single_buffer_weights:
            # Grid-invariant weights: fetched once, no idle second buffer.
            wk_spec = pl.BlockSpec((D, S), lambda g: (0, 0),
                                   pipeline_mode=pl.Buffered(1))
            wv_spec = pl.BlockSpec((S, Dp), lambda g: (0, 0),
                                   pipeline_mode=pl.Buffered(1))
        else:
            wk_spec = pl.BlockSpec((D, S), lambda g: (0, 0))
            wv_spec = pl.BlockSpec((S, Dp), lambda g: (0, 0))
        return pl.pallas_call(
            _ea_kernel,
            out_shape=jax.ShapeDtypeStruct((Bp, N, Dp), out_dtype),
            grid_spec=pltpu.PrefetchScalarGridSpec(
                num_scalar_prefetch=0,
                grid=(Bp // Bb,),
                in_specs=[
                    pl.BlockSpec((Bb, N, D), lambda g: (g, 0, 0)),
                    wk_spec,
                    wv_spec,
                ],
                out_specs=pl.BlockSpec((Bb, N, Dp), lambda g: (g, 0, 0)),
            ),
            compiler_params=pltpu.CompilerParams(
                dimension_semantics=("parallel",),
                vmem_limit_bytes=vmem_limit,
            ),
        )

    try:
        out = build(True)(queries, wk_t, wv_t)
    except Exception:
        # Fallback if this Pallas build rejects single-buffered (Buffered(1)) specs.
        out = build(False)(queries, wk_t, wv_t)

    return out[:B, :, :D]


# ----------------------------------------------------------------------------
# Reference + self-test
# ----------------------------------------------------------------------------
def _reference(queries, wk_t, wv_t):
    attn = jnp.einsum("bnd,ds->bns", queries, wk_t)
    attn = jax.nn.softmax(attn, axis=1)                  # over N (dim=1)
    attn = attn / jnp.sum(attn, axis=2, keepdims=True)   # over S (dim=2)
    return jnp.einsum("bns,sd->bnd", attn, wv_t)


if __name__ == "__main__":
    B, N, D, S = 2, 8, 32, 64

    key = jax.random.PRNGKey(0)
    kq, kk, kv = jax.random.split(key, 3)

    queries = jax.random.normal(kq, (B, N, D), dtype=jnp.float32)
    # nn.Linear init: normal(std=0.001), no bias.
    # mk.weight: (S, D) -> stored transposed (D, S); mv.weight: (D, S) -> (S, D)
    wk_t = (0.001 * jax.random.normal(kk, (S, D), dtype=jnp.float32)).T
    wv_t = (0.001 * jax.random.normal(kv, (D, S), dtype=jnp.float32)).T

    out = single_head_external_attention(queries, wk_t, wv_t)
    out = jax.block_until_ready(out)

    ref = _reference(queries, wk_t, wv_t)
    assert out.shape == (B, N, D)
    # approx reciprocal (EUP) on the final scale => slightly loosened tolerance
    assert jnp.allclose(out, ref, atol=1e-5, rtol=1e-2), "mismatch vs reference"

    # bf16 I/O smoke test (HBM-bound caller path); loose check only.
    out_bf16 = single_head_external_attention(
        queries, wk_t, wv_t, compute_dtype=jnp.bfloat16)
    out_bf16 = jax.block_until_ready(out_bf16)
    assert out_bf16.shape == (B, N, D)
    assert bool(jnp.isfinite(out_bf16.astype(jnp.float32)).all())

    print("KERNEL_OK")
</pallas_src>

<mosaic_0001>
module attributes {stable_mosaic.version = 11 : i64} {
  func.func @_ea_kernel(%arg0: i32, %arg1: memref<2x8x32xf32, #tpu.memory_space<vmem>>, %arg2: memref<32x64xf32, #tpu.memory_space<vmem>>, %arg3: memref<64x128xf32, #tpu.memory_space<vmem>>, %arg4: memref<2x8x128xf32, #tpu.memory_space<vmem>>) attributes {dimension_semantics = [#tpu.dimension_semantics<parallel>], iteration_bounds = array<i64: 1>, scalar_prefetch = 0 : i64, scratch_operands = 0 : i64, tpu.core_type = #tpu.core_type<tc>, window_params = [{transform_indices = @transform_0, window_bounds = array<i64: 2, 8, 32>}, {pipeline_mode = #tpu.pipeline_mode<synchronous>, transform_indices = @transform_1, window_bounds = array<i64: 32, 64>}, {pipeline_mode = #tpu.pipeline_mode<synchronous>, transform_indices = @transform_2, window_bounds = array<i64: 64, 128>}, {transform_indices = @transform_3, window_bounds = array<i64: 2, 8, 128>}]} {
    %c0 = arith.constant 0 : index
    %c0_0 = arith.constant 0 : index
    %c0_1 = arith.constant 0 : index
    %0 = vector.load %arg1[%c0, %c0_0, %c0_1] : memref<2x8x32xf32, #tpu.memory_space<vmem>>, vector<2x8x32xf32>
    %1 = vector.shape_cast %0 : vector<2x8x32xf32> to vector<16x32xf32>
    %c0_2 = arith.constant 0 : index
    %c0_3 = arith.constant 0 : index
    %2 = vector.load %arg2[%c0_2, %c0_3] : memref<32x64xf32, #tpu.memory_space<vmem>>, vector<32x64xf32>
    %cst = arith.constant dense<0.000000e+00> : vector<16x64xf32>
    %3 = tpu.matmul %1, %2, %cst {dimension_numbers = #tpu.dot_dimension_numbers<[1], [0], [0], [1], [0, 0, 1, 1], [], []>} : vector<16x32xf32>, vector<32x64xf32>, vector<16x64xf32> -> vector<16x64xf32>
    %4 = vector.shape_cast %3 : vector<16x64xf32> to vector<2x8x64xf32>
    %cst_4 = arith.constant dense<0xFF800000> : vector<2x64xf32>
    %5 = vector.multi_reduction <maximumf>, %4, %cst_4 [1] : vector<2x8x64xf32> to vector<2x64xf32>
    %6 = vector.shape_cast %5 : vector<2x64xf32> to vector<2x1x64xf32>
    %7 = vector.broadcast %6 : vector<2x1x64xf32> to vector<2x8x64xf32>
    %8 = arith.subf %4, %7 : vector<2x8x64xf32>
    %9 = math.exp %8 : vector<2x8x64xf32>
    %cst_5 = arith.constant dense<0.000000e+00> : vector<2x64xf32>
    %10 = vector.multi_reduction <add>, %9, %cst_5 [1] : vector<2x8x64xf32> to vector<2x64xf32>
    %11 = vector.shape_cast %10 : vector<2x64xf32> to vector<2x1x64xf32>
    %12 = tpu.reciprocal %11 : vector<2x1x64xf32> -> vector<2x1x64xf32>
    %13 = vector.broadcast %12 : vector<2x1x64xf32> to vector<2x8x64xf32>
    %14 = arith.mulf %9, %13 : vector<2x8x64xf32>
    %cst_6 = arith.constant dense<0.000000e+00> : vector<2x8xf32>
    %15 = vector.multi_reduction <add>, %14, %cst_6 [2] : vector<2x8x64xf32> to vector<2x8xf32>
    %16 = vector.shape_cast %15 : vector<2x8xf32> to vector<2x8x1xf32>
    %17 = vector.shape_cast %14 : vector<2x8x64xf32> to vector<16x64xf32>
    %c0_7 = arith.constant 0 : index
    %c0_8 = arith.constant 0 : index
    %18 = vector.load %arg3[%c0_7, %c0_8] : memref<64x128xf32, #tpu.memory_space<vmem>>, vector<64x128xf32>
    %cst_9 = arith.constant dense<0.000000e+00> : vector<16x128xf32>
    %19 = tpu.matmul %17, %18, %cst_9 {dimension_numbers = #tpu.dot_dimension_numbers<[1], [0], [0], [1], [0, 0, 1, 1], [], []>} : vector<16x64xf32>, vector<64x128xf32>, vector<16x128xf32> -> vector<16x128xf32>
    %20 = vector.shape_cast %19 : vector<16x128xf32> to vector<2x8x128xf32>
    %21 = tpu.reciprocal %16 {approx = true} : vector<2x8x1xf32> -> vector<2x8x1xf32>
    %22 = vector.broadcast %21 : vector<2x8x1xf32> to vector<2x8x128xf32>
    %23 = arith.mulf %20, %22 : vector<2x8x128xf32>
    %c0_10 = arith.constant 0 : index
    %c0_11 = arith.constant 0 : index
    %c0_12 = arith.constant 0 : index
    %24 = vector.load %arg4[%c0_10, %c0_11, %c0_12] : memref<2x8x128xf32, #tpu.memory_space<vmem>>, vector<2x8x128xf32>
    tpu.vector_store %arg4[%c0_10, %c0_11, %c0_12], %23 {strides = array<i32>} : memref<2x8x128xf32, #tpu.memory_space<vmem>>, vector<2x8x128xf32>,
    return
  }
  func.func @transform_0(%arg0: i32) -> (i32, i32, i32) {
    %c0_i32 = arith.constant 0 : i32
    %c0_i32_0 = arith.constant 0 : i32
    %c0_i32_1 = arith.constant 0 : i32
    return %arg0, %c0_i32, %c0_i32_0 : i32, i32, i32
  }
  func.func @transform_1(%arg0: i32) -> (i32, i32) {
    %c0_i32 = arith.constant 0 : i32
    %c0_i32_0 = arith.constant 0 : i32
    %c0_i32_1 = arith.constant 0 : i32
    return %c0_i32, %c0_i32_0 : i32, i32
  }
  func.func @transform_2(%arg0: i32) -> (i32, i32) {
    %c0_i32 = arith.constant 0 : i32
    %c0_i32_0 = arith.constant 0 : i32
    %c0_i32_1 = arith.constant 0 : i32
    return %c0_i32, %c0_i32_0 : i32, i32
  }
  func.func @transform_3(%arg0: i32) -> (i32, i32, i32) {
    %c0_i32 = arith.constant 0 : i32
    %c0_i32_0 = arith.constant 0 : i32
    %c0_i32_1 = arith.constant 0 : i32
    return %arg0, %c0_i32, %c0_i32_0 : i32, i32, i32
  }
}

module attributes {stable_mosaic.version = 11 : i64} {
  func.func @_ea_kernel(%arg0: i32, %arg1: memref<2x8x32xf32, #tpu.memory_space<vmem>>, %arg2: memref<32x64xf32, #tpu.memory_space<vmem>>, %arg3: memref<64x128xf32, #tpu.memory_space<vmem>>, %arg4: memref<2x8x128xf32, #tpu.memory_space<vmem>>) attributes {dimension_semantics = [#tpu.dimension_semantics<parallel>], iteration_bounds = array<i64: 1>, scalar_prefetch = 0 : i64, scratch_operands = 0 : i64, tpu.core_type = #tpu.core_type<tc>, window_params = [{transform_indices = @transform_0, window_bounds = array<i64: 2, 8, 32>}, {pipeline_mode = #tpu.pipeline_mode<synchronous>, transform_indices = @transform_1, window_bounds = array<i64: 32, 64>}, {pipeline_mode = #tpu.pipeline_mode<synchronous>, transform_indices = @transform_2, window_bounds = array<i64: 64, 128>}, {transform_indices = @transform_3, window_bounds = array<i64: 2, 8, 128>}]} {
    %c0 = arith.constant 0 : index
    %c0_0 = arith.constant 0 : index
    %c0_1 = arith.constant 0 : index
    %0 = vector.load %arg1[%c0, %c0_0, %c0_1] : memref<2x8x32xf32, #tpu.memory_space<vmem>>, vector<2x8x32xf32>
    %1 = vector.shape_cast %0 : vector<2x8x32xf32> to vector<16x32xf32>
    %c0_2 = arith.constant 0 : index
    %c0_3 = arith.constant 0 : index
    %2 = vector.load %arg2[%c0_2, %c0_3] : memref<32x64xf32, #tpu.memory_space<vmem>>, vector<32x64xf32>
    %cst = arith.constant dense<0.000000e+00> : vector<16x64xf32>
    %3 = tpu.matmul %1, %2, %cst {dimension_numbers = #tpu.dot_dimension_numbers<[1], [0], [0], [1], [0, 0, 1, 1], [], []>} : vector<16x32xf32>, vector<32x64xf32>, vector<16x64xf32> -> vector<16x64xf32>
    %4 = vector.shape_cast %3 : vector<16x64xf32> to vector<2x8x64xf32>
    %cst_4 = arith.constant dense<0xFF800000> : vector<2x64xf32>
    %5 = vector.multi_reduction <maximumf>, %4, %cst_4 [1] : vector<2x8x64xf32> to vector<2x64xf32>
    %6 = vector.shape_cast %5 : vector<2x64xf32> to vector<2x1x64xf32>
    %7 = vector.broadcast %6 : vector<2x1x64xf32> to vector<2x8x64xf32>
    %8 = arith.subf %4, %7 : vector<2x8x64xf32>
    %9 = math.exp %8 : vector<2x8x64xf32>
    %cst_5 = arith.constant dense<0.000000e+00> : vector<2x64xf32>
    %10 = vector.multi_reduction <add>, %9, %cst_5 [1] : vector<2x8x64xf32> to vector<2x64xf32>
    %11 = vector.shape_cast %10 : vector<2x64xf32> to vector<2x1x64xf32>
    %12 = tpu.reciprocal %11 : vector<2x1x64xf32> -> vector<2x1x64xf32>
    %13 = vector.broadcast %12 : vector<2x1x64xf32> to vector<2x8x64xf32>
    %14 = arith.mulf %9, %13 : vector<2x8x64xf32>
    %cst_6 = arith.constant dense<0.000000e+00> : vector<2x8xf32>
    %15 = vector.multi_reduction <add>, %14, %cst_6 [2] : vector<2x8x64xf32> to vector<2x8xf32>
    %16 = vector.shape_cast %15 : vector<2x8xf32> to vector<2x8x1xf32>
    %17 = vector.shape_cast %14 : vector<2x8x64xf32> to vector<16x64xf32>
    %c0_7 = arith.constant 0 : index
    %c0_8 = arith.constant 0 : index
    %18 = vector.load %arg3[%c0_7, %c0_8] : memref<64x128xf32, #tpu.memory_space<vmem>>, vector<64x128xf32>
    %cst_9 = arith.constant dense<0.000000e+00> : vector<16x128xf32>
    %19 = tpu.matmul %17, %18, %cst_9 {dimension_numbers = #tpu.dot_dimension_numbers<[1], [0], [0], [1], [0, 0, 1, 1], [], []>} : vector<16x64xf32>, vector<64x128xf32>, vector<16x128xf32> -> vector<16x128xf32>
    %20 = vector.shape_cast %19 : vector<16x128xf32> to vector<2x8x128xf32>
    %21 = tpu.reciprocal %16 {approx = true} : vector<2x8x1xf32> -> vector<2x8x1xf32>
    %22 = vector.broadcast %21 : vector<2x8x1xf32> to vector<2x8x128xf32>
    %23 = arith.mulf %20, %22 : vector<2x8x128xf32>
    %c0_10 = arith.constant 0 : index
    %c0_11 = arith.constant 0 : index
    %c0_12 = arith.constant 0 : index
    %24 = vector.load %arg4[%c0_10, %c0_11, %c0_12] : memref<2x8x128xf32, #tpu.memory_space<vmem>>, vector<2x8x128xf32>
    tpu.vector_store %arg4[%c0_10, %c0_11, %c0_12], %23 {strides = array<i32>} : memref<2x8x128xf32, #tpu.memory_space<vmem>>, vector<2x8x128xf32>,
    return
  }
  func.func @transform_0(%arg0: i32) -> (i32, i32, i32) {
    %c0_i32 = arith.constant 0 : i32
    %c0_i32_0 = arith.constant 0 : i32
    %c0_i32_1 = arith.constant 0 : i32
    return %arg0, %c0_i32, %c0_i32_0 : i32, i32, i32
  }
  func.func @transform_1(%arg0: i32) -> (i32, i32) {
    %c0_i32 = arith.constant 0 : i32
    %c0_i32_0 = arith.constant 0 : i32
    %c0_i32_1 = arith.constant 0 : i32
    return %c0_i32, %c0_i32_0 : i32, i32
  }
  func.func @transform_2(%arg0: i32) -> (i32, i32) {
    %c0_i32 = arith.constant 0 : i32
    %c0_i32_0 = arith.constant 0 : i32
    %c0_i32_1 = arith.constant 0 : i32
    return %c0_i32, %c0_i32_0 : i32, i32
  }
  func.func @transform_3(%arg0: i32) -> (i32, i32, i32) {
    %c0_i32 = arith.constant 0 : i32
    %c0_i32_0 = arith.constant 0 : i32
    %c0_i32_1 = arith.constant 0 : i32
    return %arg0, %c0_i32, %c0_i32_0 : i32, i32, i32
  }
}

</mosaic_0001>

<llo_original>
// kernel: tpu_custom_call.1
$region0: #{tpu_custom_call.1}
  #allocation0 [shape = 'u32[]', space=smem, size = 0x4, offset = 0x4, fixed_abs, tag = 'smem constant byte address 0x4 - core index']
  #allocation1 [shape = 'u32[144,128]{1,0:T(1,128)}', space=vmem, size = 0x12000, scoped, tag = 'internal scratch']
  %s0 = inlined_call_operand.hbm [shape: f32[2,8,32], index: 0, kind: input, shape index: {}]
  %s1 = inlined_call_operand.hbm [shape: f32[32,64], index: 1, kind: input, shape index: {}]
  %s2 = inlined_call_operand.hbm [shape: f32[64,128], index: 2, kind: input, shape index: {}]
  %s3 = inlined_call_operand.hbm [shape: f32[2,8,128], index: 3, kind: output, shape index: {}]
  %s4 = sld [smem:[#allocation0]]
  $region34: #{tpu_custom_call.1} parent=0
    _
  %s6 = ssub.s32 1, %s4
  %s7 = scalar_select 0, %s6, %s4
  $region1: #{tpu_custom_call.1} parent=0
    #allocation2 [shape = 'u8[8192]{0}', space=vmem, size = 0x2000, scoped, tag = 'input window, operand 0, single buffered']
    #allocation3 [shape = 's32[1]{0}', space=sflag, size = 0x4, scoped, tag = 'scoped memory for tpu_custom_call.1']
    #allocation4 [shape = 's32[1]{0}', space=sflag, size = 0x4, scoped, tag = 'scoped memory for tpu_custom_call.1']
    #allocation5 [shape = 'u8[16384]{0}', space=vmem, size = 0x4000, scoped, tag = 'input window, operand 1, single buffered']
    #allocation6 [shape = 's32[1]{0}', space=sflag, size = 0x4, scoped, tag = 'scoped memory for tpu_custom_call.1']
    #allocation7 [shape = 'u8[32768]{0}', space=vmem, size = 0x8000, scoped, tag = 'input window, operand 2, single buffered']
    #allocation8 [shape = 'u8[8192]{0}', space=vmem, size = 0x2000, scoped, tag = 'output window, operand 0, single buffered']
    %8 = vsyncpa [#allocation3], 0
    %9 = vsyncpa [#allocation6], 0
    %10 = vsyncpa [#allocation4], 0
    // Predicated region
    $region2: #{tpu_custom_call.1} parent=1 // pred_check
      _
    $region3: #{tpu_custom_call.1} parent=1 // pred_check_branch
      %12 = sbr.rel (0) target = $region5
    $region4: #{tpu_custom_call.1} parent=1 // pred_region
      %s14 = ssub.s32 256, 256
      %15 = vsyncadd [#allocation3], %s14
      %s16 = sshll.u32 [#allocation2], 4
      %s17 = int_to_ptr.vmem [resolvable:$true] %s16
      %22 = dma.hbm_to_vmem [thread:$0]  %s0, 256, %s17, [#allocation3], 128, 128, 8
    $region5: #{tpu_custom_call.1} parent=1 // pred_fallthru
      _
    // Predicated region
    $region6: #{tpu_custom_call.1} parent=1 // pred_check
      _
    $region7: #{tpu_custom_call.1} parent=1 // pred_check_branch
      %24 = sbr.rel (0) target = $region9
    $region8: #{tpu_custom_call.1} parent=1 // pred_region
      %s26 = ssub.s32 512, 512
      %27 = vsyncadd [#allocation6], %s26
      %s28 = sshll.u32 [#allocation5], 4
      %s29 = int_to_ptr.vmem [resolvable:$true] %s28
      %34 = dma.hbm_to_vmem [thread:$0]  %s1, 512, %s29, [#allocation6], 128, 128, 8
    $region9: #{tpu_custom_call.1} parent=1 // pred_fallthru
      _
    // Predicated region
    $region10: #{tpu_custom_call.1} parent=1 // pred_check
      _
    $region11: #{tpu_custom_call.1} parent=1 // pred_check_branch
      %36 = sbr.rel (0) target = $region13
    $region12: #{tpu_custom_call.1} parent=1 // pred_region
      %s38 = ssub.s32 1024, 1024
      %39 = vsyncadd [#allocation6], %s38
      %s40 = sshll.u32 [#allocation7], 4
      %s41 = int_to_ptr.vmem [resolvable:$true] %s40
      %46 = dma.hbm_to_vmem [thread:$0]  %s2, 1024, %s41, [#allocation6], 128, 128, 8
    $region13: #{tpu_custom_call.1} parent=1 // pred_fallthru
      _
    // Predicated region
    $region14: #{tpu_custom_call.1} parent=1 // pred_check
      _
    $region15: #{tpu_custom_call.1} parent=1 // pred_check_branch
      %48 = sbr.rel (0) target = $region17
    $region16: #{tpu_custom_call.1} parent=1 // pred_region
      %49 = dma.done [#allocation3], 256
    $region17: #{tpu_custom_call.1} parent=1 // pred_fallthru
      _
    // Predicated region
    $region18: #{tpu_custom_call.1} parent=1 // pred_check
      _
    $region19: #{tpu_custom_call.1} parent=1 // pred_check_branch
      %51 = sbr.rel (0) target = $region21
    $region20: #{tpu_custom_call.1} parent=1 // pred_region
      %52 = dma.done [#allocation6], 512
    $region21: #{tpu_custom_call.1} parent=1 // pred_fallthru
      _
    // Predicated region
    $region22: #{tpu_custom_call.1} parent=1 // pred_check
      _
    $region23: #{tpu_custom_call.1} parent=1 // pred_check_branch
      %54 = sbr.rel (0) target = $region25
    $region24: #{tpu_custom_call.1} parent=1 // pred_region
      %55 = dma.done [#allocation6], 1024
    $region25: #{tpu_custom_call.1} parent=1 // pred_fallthru
      _
    %v56 = vld [vmem:[#allocation2] sm:$0xff]
    %v57 = vld [vmem:[#allocation2 + $0x8] sm:$0xff]
    %v58 = vld [vmem:[#allocation5] sm:$0xff]
    %v59 = vld [vmem:[#allocation5 + $0x8] sm:$0xff]
    %v60 = vld [vmem:[#allocation5 + $0x10] sm:$0xff]
    %v61 = vld [vmem:[#allocation5 + $0x18] sm:$0xff]
    %vm62 = vcmask 261120
    %v64 = vsel %vm62, %v56, 0
    %v67 = vsel %vm62, %v57, 0
    %69 = vmatprep.subr.mxu0 0.0
    %70 = vmatpush1.msra.mxu0 %v58
    %71 = vmatprep.subr.mxu0 0.0
    %72 = vmatpush1.msra.mxu0 %v59
    %73 = vmatprep.subr.mxu0 0.0
    %74 = vmatpush1.msra.mxu0 %v60
    %75 = vmatprep.subr.mxu0 0.0
    %76 = vmatpush1.msra.mxu0 %v61
    %77 = vmatprep.subr.mxu0 0.0
    %78 = vmatpush1.msra.mxu0 0.0
    %79 = vmatprep.subr.mxu0 0.0
    %80 = vmatpush1.msra.mxu0 0.0
    %81 = vmatprep.subr.mxu0 0.0
    %82 = vmatpush1.msra.mxu0 0.0
    %83 = vmatprep.subr.mxu0 0.0
    %84 = vmatpush1.msra.mxu0 0.0
    %85 = vmatprep.subr.mxu0 0.0
    %86 = vmatpush1.msra.mxu0 0.0
    %87 = vmatprep.subr.mxu0 0.0
    %88 = vmatpush1.msra.mxu0 0.0
    %89 = vmatprep.subr.mxu0 0.0
    %90 = vmatpush1.msra.mxu0 0.0
    %91 = vmatprep.subr.mxu0 0.0
    %92 = vmatpush1.msra.mxu0 0.0
    %93 = vmatprep.subr.mxu0 0.0
    %94 = vmatpush1.msra.mxu0 0.0
    %95 = vmatprep.subr.mxu0 0.0
    %96 = vmatpush1.msra.mxu0 0.0
    %97 = vmatprep.subr.mxu0 0.0
    %98 = vmatpush1.msra.mxu0 0.0
    %99 = vmatprep.subr.mxu0 0.0
    %100 = vmatpush1.msra.mxu0 0.0
    %101 = vmatprep.subr.mxu0 0.0
    %102 = vmatpush1.msra.mxu0 0.0
    %103 = vmatprep.subr.mxu0 0.0
    %104 = vmatpush1.msra.mxu0 0.0
    %105 = vmatprep.subr.mxu0 0.0
    %106 = vmatpush1.msra.mxu0 0.0
    %107 = vmatprep.subr.mxu0 0.0
    %108 = vmatpush1.msra.mxu0 0.0
    %109 = vmatprep.subr.mxu0 0.0
    %110 = vmatpush1.msra.mxu0 0.0
    %111 = vmatprep.subr.mxu0 0.0
    %112 = vmatpush1.msra.mxu0 0.0
    %113 = vmatprep.subr.mxu0 0.0
    %114 = vmatpush1.msra.mxu0 0.0
    %115 = vmatprep.subr.mxu0 0.0
    %116 = vmatpush1.msra.mxu0 0.0
    %117 = vmatprep.subr.mxu0 0.0
    %118 = vmatpush1.msra.mxu0 0.0
    %119 = vmatprep.subr.mxu0 0.0
    %120 = vmatpush1.msra.mxu0 0.0
    %121 = vmatprep.subr.mxu0 0.0
    %122 = vmatpush1.msra.mxu0 0.0
    %123 = vmatprep.subr.mxu0 0.0
    %124 = vmatpush1.msra.mxu0 0.0
    %125 = vmatprep.subr.mxu0 0.0
    %126 = vmatpush1.msra.mxu0 0.0
    %127 = vmatprep.subr.mxu0 0.0
    %128 = vmatpush1.msra.mxu0 0.0
    %129 = vmatprep.subr.mxu0 0.0
    %130 = vmatpush1.msra.mxu0 0.0
    %131 = vmatprep.subr.mxu0 0.0
    %132 = vmatpush1.msra.mxu0 0.0
    %133 = vmatprep.mubr.f32.mxu0 0.0
    %134 = vmatmul.mubr.f32.gmra.mrb[0].mxu0 %v64
    %v135 = vpop.f32.mrb[0].mxu0
    %v136 = vadd.f32 0.0, %v135
    %v137 = vpop.f32.mrb[0].mxu0
    %138 = vmatprep.mubr.f32.mxu0 0.0
    %139 = vmatmul.mubr.f32.gmra.mrb[0].mxu0 %v67
    %v140 = vpop.f32.mrb[0].mxu0
    %v141 = vadd.f32 0.0, %v140
    %v142 = vpop.f32.mrb[0].mxu0
    %143 = vdwg.mxu0
    %vm144 = vcmask 523264
    %v145 = vsel %vm144, %v136, -inf
    %v146 = vrot.slane %v145, 4
    %v147 = vmax.f32 %v145, %v146
    %v148 = vrot.slane %v147, 2
    %v149 = vmax.f32 %v147, %v148
    %v150 = vrot.slane %v149, 1
    %v151 = vmax.f32 %v149, %v150
    %v152 = vsel %vm144, %v141, -inf
    %v153 = vrot.slane %v152, 4
    %v154 = vmax.f32 %v152, %v153
    %v155 = vrot.slane %v154, 2
    %v156 = vmax.f32 %v154, %v155
    %v157 = vrot.slane %v156, 1
    %v158 = vmax.f32 %v156, %v157
    %v159 = vsub.f32 %v136, %v151
    %v160 = vsub.f32 %v141, %v158
    %v161 = vmul.f32 %v159, 1.442695
    %v162 = vpow.pop %v161
    %v163 = vmul.f32 %v160, 1.442695
    %v164 = vpow.pop %v163
    %v165 = vsel %vm144, %v162, 0.0
    %v166 = vrot.slane %v165, 4
    %v167 = vadd.f32 %v165, %v166
    %v168 = vrot.slane %v167, 2
    %v169 = vadd.f32 %v167, %v168
    %v170 = vrot.slane %v169, 1
    %v171 = vadd.f32 %v169, %v170
    %v172 = vsel %vm144, %v164, 0.0
    %v173 = vrot.slane %v172, 4
    %v174 = vadd.f32 %v172, %v173
    %v175 = vrot.slane %v174, 2
    %v176 = vadd.f32 %v174, %v175
    %v177 = vrot.slane %v176, 1
    %v178 = vadd.f32 %v176, %v177
    %v179 = vrcp.pop %v171
    %v180 = vrcp.pop %v178
    %v181 = vmul.f32 %v162, %v179
    %v182 = vmul.f32 %v164, %v180
    %v183 = vsel %vm144, %v181, 0.0
    %184 = vadd.xlane.f32.xlu0 %v183
    %v185 = vpop.xlane.xlu0 %184
    %v186 = vsel %vm144, %v182, 0.0
    %187 = vadd.xlane.f32.xlu0 %v186
    %v188 = vpop.xlane.xlu0 %187
    %v189 = vld [vmem:[#allocation7] sm:$0xff]
    %v190 = vld [vmem:[#allocation7 + $0x8] sm:$0xff]
    %v191 = vld [vmem:[#allocation7 + $0x10] sm:$0xff]
    %v192 = vld [vmem:[#allocation7 + $0x18] sm:$0xff]
    %v193 = vld [vmem:[#allocation7 + $0x20] sm:$0xff]
    %v194 = vld [vmem:[#allocation7 + $0x28] sm:$0xff]
    %v195 = vld [vmem:[#allocation7 + $0x30] sm:$0xff]
    %v196 = vld [vmem:[#allocation7 + $0x38] sm:$0xff]
    %v198 = vsel %vm144, %v181, 0
    %v201 = vsel %vm144, %v182, 0
    %203 = vmatprep.subr.mxu0 0.0
    %204 = vmatpush1.msra.mxu0 %v189
    %205 = vmatprep.subr.mxu0 0.0
    %206 = vmatpush1.msra.mxu0 %v190
    %207 = vmatprep.subr.mxu0 0.0
    %208 = vmatpush1.msra.mxu0 %v191
    %209 = vmatprep.subr.mxu0 0.0
    %210 = vmatpush1.msra.mxu0 %v192
    %211 = vmatprep.subr.mxu0 0.0
    %212 = vmatpush1.msra.mxu0 %v193
    %213 = vmatprep.subr.mxu0 0.0
    %214 = vmatpush1.msra.mxu0 %v194
    %215 = vmatprep.subr.mxu0 0.0
    %216 = vmatpush1.msra.mxu0 %v195
    %217 = vmatprep.subr.mxu0 0.0
    %218 = vmatpush1.msra.mxu0 %v196
    %219 = vmatprep.subr.mxu0 0.0
    %220 = vmatpush1.msra.mxu0 0.0
    %221 = vmatprep.subr.mxu0 0.0
    %222 = vmatpush1.msra.mxu0 0.0
    %223 = vmatprep.subr.mxu0 0.0
    %224 = vmatpush1.msra.mxu0 0.0
    %225 = vmatprep.subr.mxu0 0.0
    %226 = vmatpush1.msra.mxu0 0.0
    %227 = vmatprep.subr.mxu0 0.0
    %228 = vmatpush1.msra.mxu0 0.0
    %229 = vmatprep.subr.mxu0 0.0
    %230 = vmatpush1.msra.mxu0 0.0
    %231 = vmatprep.subr.mxu0 0.0
    %232 = vmatpush1.msra.mxu0 0.0
    %233 = vmatprep.subr.mxu0 0.0
    %234 = vmatpush1.msra.mxu0 0.0
    %235 = vmatprep.subr.mxu0 0.0
    %236 = vmatpush1.msra.mxu0 0.0
    %237 = vmatprep.subr.mxu0 0.0
    %238 = vmatpush1.msra.mxu0 0.0
    %239 = vmatprep.subr.mxu0 0.0
    %240 = vmatpush1.msra.mxu0 0.0
    %241 = vmatprep.subr.mxu0 0.0
    %242 = vmatpush1.msra.mxu0 0.0
    %243 = vmatprep.subr.mxu0 0.0
    %244 = vmatpush1.msra.mxu0 0.0
    %245 = vmatprep.subr.mxu0 0.0
    %246 = vmatpush1.msra.mxu0 0.0
    %247 = vmatprep.subr.mxu0 0.0
    %248 = vmatpush1.msra.mxu0 0.0
    %249 = vmatprep.subr.mxu0 0.0
    %250 = vmatpush1.msra.mxu0 0.0
    %251 = vmatprep.subr.mxu0 0.0
    %252 = vmatpush1.msra.mxu0 0.0
    %253 = vmatprep.subr.mxu0 0.0
    %254 = vmatpush1.msra.mxu0 0.0
    %255 = vmatprep.subr.mxu0 0.0
    %256 = vmatpush1.msra.mxu0 0.0
    %257 = vmatprep.subr.mxu0 0.0
    %258 = vmatpush1.msra.mxu0 0.0
    %259 = vmatprep.subr.mxu0 0.0
    %260 = vmatpush1.msra.mxu0 0.0
    %261 = vmatprep.subr.mxu0 0.0
    %262 = vmatpush1.msra.mxu0 0.0
    %263 = vmatprep.subr.mxu0 0.0
    %264 = vmatpush1.msra.mxu0 0.0
    %265 = vmatprep.subr.mxu0 0.0
    %266 = vmatpush1.msra.mxu0 0.0
    %267 = vmatprep.mubr.f32.mxu0 0.0
    %268 = vmatmul.mubr.f32.gmra.mrb[0].mxu0 %v198
    %v269 = vpop.f32.mrb[0].mxu0
    %v270 = vadd.f32 0.0, %v269
    %v271 = vpop.f32.mrb[0].mxu0
    %272 = vmatprep.mubr.f32.mxu0 0.0
    %273 = vmatmul.mubr.f32.gmra.mrb[0].mxu0 %v201
    %v274 = vpop.f32.mrb[0].mxu0
    %v275 = vadd.f32 0.0, %v274
    %v276 = vpop.f32.mrb[0].mxu0
    %277 = vdwg.mxu0
    %v278 = vrcp.pop %v185
    %v279 = vrcp.pop %v188
    %v280 = vmul.f32 %v270, %v278
    %v281 = vmul.f32 %v275, %v279
    %282 = vst [vmem:[#allocation8] sm:$0xff] %v280
    %283 = vst [vmem:[#allocation8 + $0x8] sm:$0xff] %v281
    // Predicated region
    $region26: #{tpu_custom_call.1} parent=1 // pred_check
      _
    $region27: #{tpu_custom_call.1} parent=1 // pred_check_branch
      %285 = sbr.rel (0) target = $region29
    $region28: #{tpu_custom_call.1} parent=1 // pred_region
      %s287 = ssub.s32 256, 256
      %288 = vsyncadd [#allocation4], %s287
      %s289 = sshll.u32 [#allocation8], 4
      %s290 = int_to_ptr.vmem [resolvable:$true] %s289
      %295 = dma.vmem_to_hbm [thread:$0]  %s290, 256, %s3, [#allocation4], 128, 128, 8
    $region29: #{tpu_custom_call.1} parent=1 // pred_fallthru
      _
    // Predicated region
    $region30: #{tpu_custom_call.1} parent=1 // pred_check
      _
    $region31: #{tpu_custom_call.1} parent=1 // pred_check_branch
      %297 = sbr.rel (0) target = $region33
    $region32: #{tpu_custom_call.1} parent=1 // pred_region
      %298 = dma.done [#allocation4], 256
    $region33: #{tpu_custom_call.1} parent=1 // pred_fallthru
      _
    %299 = vsyncpa [#allocation3], 1
    %300 = vsyncpa [#allocation6], 1
    %301 = vsyncpa [#allocation4], 1

// kernel: tpu_custom_call.1
$region0: #{tpu_custom_call.1}
  #allocation0 [shape = 'u32[]', space=smem, size = 0x4, offset = 0x4, fixed_abs, tag = 'smem constant byte address 0x4 - core index']
  #allocation1 [shape = 'u32[144,128]{1,0:T(1,128)}', space=vmem, size = 0x12000, scoped, tag = 'internal scratch']
  %s0 = inlined_call_operand.hbm [shape: f32[2,8,32], index: 0, kind: input, shape index: {}]
  %s1 = inlined_call_operand.hbm [shape: f32[32,64], index: 1, kind: input, shape index: {}]
  %s2 = inlined_call_operand.hbm [shape: f32[64,128], index: 2, kind: input, shape index: {}]
  %s3 = inlined_call_operand.hbm [shape: f32[2,8,128], index: 3, kind: output, shape index: {}]
  %s4 = sld [smem:[#allocation0]]
  $region34: #{tpu_custom_call.1} parent=0
    _
  %s6 = ssub.s32 1, %s4
  %s7 = scalar_select 0, %s6, %s4
  $region1: #{tpu_custom_call.1} parent=0
    #allocation2 [shape = 'u8[8192]{0}', space=vmem, size = 0x2000, scoped, tag = 'input window, operand 0, single buffered']
    #allocation3 [shape = 's32[1]{0}', space=sflag, size = 0x4, scoped, tag = 'scoped memory for tpu_custom_call.1']
    #allocation4 [shape = 's32[1]{0}', space=sflag, size = 0x4, scoped, tag = 'scoped memory for tpu_custom_call.1']
    #allocation5 [shape = 'u8[16384]{0}', space=vmem, size = 0x4000, scoped, tag = 'input window, operand 1, single buffered']
    #allocation6 [shape = 's32[1]{0}', space=sflag, size = 0x4, scoped, tag = 'scoped memory for tpu_custom_call.1']
    #allocation7 [shape = 'u8[32768]{0}', space=vmem, size = 0x8000, scoped, tag = 'input window, operand 2, single buffered']
    #allocation8 [shape = 'u8[8192]{0}', space=vmem, size = 0x2000, scoped, tag = 'output window, operand 0, single buffered']
    %8 = vsyncpa [#allocation3], 0
    %9 = vsyncpa [#allocation6], 0
    %10 = vsyncpa [#allocation4], 0
    // Predicated region
    $region2: #{tpu_custom_call.1} parent=1 // pred_check
      _
    $region3: #{tpu_custom_call.1} parent=1 // pred_check_branch
      %12 = sbr.rel (0) target = $region5
    $region4: #{tpu_custom_call.1} parent=1 // pred_region
      %s14 = ssub.s32 256, 256
      %15 = vsyncadd [#allocation3], %s14
      %s16 = sshll.u32 [#allocation2], 4
      %s17 = int_to_ptr.vmem [resolvable:$true] %s16
      %22 = dma.hbm_to_vmem [thread:$0]  %s0, 256, %s17, [#allocation3], 128, 128, 8
    $region5: #{tpu_custom_call.1} parent=1 // pred_fallthru
      _
    // Predicated region
    $region6: #{tpu_custom_call.1} parent=1 // pred_check
      _
    $region7: #{tpu_custom_call.1} parent=1 // pred_check_branch
      %24 = sbr.rel (0) target = $region9
    $region8: #{tpu_custom_call.1} parent=1 // pred_region
      %s26 = ssub.s32 512, 512
      %27 = vsyncadd [#allocation6], %s26
      %s28 = sshll.u32 [#allocation5], 4
      %s29 = int_to_ptr.vmem [resolvable:$true] %s28
      %34 = dma.hbm_to_vmem [thread:$0]  %s1, 512, %s29, [#allocation6], 128, 128, 8
    $region9: #{tpu_custom_call.1} parent=1 // pred_fallthru
      _
    // Predicated region
    $region10: #{tpu_custom_call.1} parent=1 // pred_check
      _
    $region11: #{tpu_custom_call.1} parent=1 // pred_check_branch
      %36 = sbr.rel (0) target = $region13
    $region12: #{tpu_custom_call.1} parent=1 // pred_region
      %s38 = ssub.s32 1024, 1024
      %39 = vsyncadd [#allocation6], %s38
      %s40 = sshll.u32 [#allocation7], 4
      %s41 = int_to_ptr.vmem [resolvable:$true] %s40
      %46 = dma.hbm_to_vmem [thread:$0]  %s2, 1024, %s41, [#allocation6], 128, 128, 8
    $region13: #{tpu_custom_call.1} parent=1 // pred_fallthru
      _
    // Predicated region
    $region14: #{tpu_custom_call.1} parent=1 // pred_check
      _
    $region15: #{tpu_custom_call.1} parent=1 // pred_check_branch
      %48 = sbr.rel (0) target = $region17
    $region16: #{tpu_custom_call.1} parent=1 // pred_region
      %49 = dma.done [#allocation3], 256
    $region17: #{tpu_custom_call.1} parent=1 // pred_fallthru
      _
    // Predicated region
    $region18: #{tpu_custom_call.1} parent=1 // pred_check
      _
    $region19: #{tpu_custom_call.1} parent=1 // pred_check_branch
      %51 = sbr.rel (0) target = $region21
    $region20: #{tpu_custom_call.1} parent=1 // pred_region
      %52 = dma.done [#allocation6], 512
    $region21: #{tpu_custom_call.1} parent=1 // pred_fallthru
      _
    // Predicated region
    $region22: #{tpu_custom_call.1} parent=1 // pred_check
      _
    $region23: #{tpu_custom_call.1} parent=1 // pred_check_branch
      %54 = sbr.rel (0) target = $region25
    $region24: #{tpu_custom_call.1} parent=1 // pred_region
      %55 = dma.done [#allocation6], 1024
    $region25: #{tpu_custom_call.1} parent=1 // pred_fallthru
      _
    %v56 = vld [vmem:[#allocation2] sm:$0xff]
    %v57 = vld [vmem:[#allocation2 + $0x8] sm:$0xff]
    %v58 = vld [vmem:[#allocation5] sm:$0xff]
    %v59 = vld [vmem:[#allocation5 + $0x8] sm:$0xff]
    %v60 = vld [vmem:[#allocation5 + $0x10] sm:$0xff]
    %v61 = vld [vmem:[#allocation5 + $0x18] sm:$0xff]
    %vm62 = vcmask 261120
    %v64 = vsel %vm62, %v56, 0
    %v67 = vsel %vm62, %v57, 0
    %69 = vmatprep.subr.mxu0 0.0
    %70 = vmatpush1.msra.mxu0 %v58
    %71 = vmatprep.subr.mxu0 0.0
    %72 = vmatpush1.msra.mxu0 %v59
    %73 = vmatprep.subr.mxu0 0.0
    %74 = vmatpush1.msra.mxu0 %v60
    %75 = vmatprep.subr.mxu0 0.0
    %76 = vmatpush1.msra.mxu0 %v61
    %77 = vmatprep.subr.mxu0 0.0
    %78 = vmatpush1.msra.mxu0 0.0
    %79 = vmatprep.subr.mxu0 0.0
    %80 = vmatpush1.msra.mxu0 0.0
    %81 = vmatprep.subr.mxu0 0.0
    %82 = vmatpush1.msra.mxu0 0.0
    %83 = vmatprep.subr.mxu0 0.0
    %84 = vmatpush1.msra.mxu0 0.0
    %85 = vmatprep.subr.mxu0 0.0
    %86 = vmatpush1.msra.mxu0 0.0
    %87 = vmatprep.subr.mxu0 0.0
    %88 = vmatpush1.msra.mxu0 0.0
    %89 = vmatprep.subr.mxu0 0.0
    %90 = vmatpush1.msra.mxu0 0.0
    %91 = vmatprep.subr.mxu0 0.0
    %92 = vmatpush1.msra.mxu0 0.0
    %93 = vmatprep.subr.mxu0 0.0
    %94 = vmatpush1.msra.mxu0 0.0
    %95 = vmatprep.subr.mxu0 0.0
    %96 = vmatpush1.msra.mxu0 0.0
    %97 = vmatprep.subr.mxu0 0.0
    %98 = vmatpush1.msra.mxu0 0.0
    %99 = vmatprep.subr.mxu0 0.0
    %100 = vmatpush1.msra.mxu0 0.0
    %101 = vmatprep.subr.mxu0 0.0
    %102 = vmatpush1.msra.mxu0 0.0
    %103 = vmatprep.subr.mxu0 0.0
    %104 = vmatpush1.msra.mxu0 0.0
    %105 = vmatprep.subr.mxu0 0.0
    %106 = vmatpush1.msra.mxu0 0.0
    %107 = vmatprep.subr.mxu0 0.0
    %108 = vmatpush1.msra.mxu0 0.0
    %109 = vmatprep.subr.mxu0 0.0
    %110 = vmatpush1.msra.mxu0 0.0
    %111 = vmatprep.subr.mxu0 0.0
    %112 = vmatpush1.msra.mxu0 0.0
    %113 = vmatprep.subr.mxu0 0.0
    %114 = vmatpush1.msra.mxu0 0.0
    %115 = vmatprep.subr.mxu0 0.0
    %116 = vmatpush1.msra.mxu0 0.0
    %117 = vmatprep.subr.mxu0 0.0
    %118 = vmatpush1.msra.mxu0 0.0
    %119 = vmatprep.subr.mxu0 0.0
    %120 = vmatpush1.msra.mxu0 0.0
    %121 = vmatprep.subr.mxu0 0.0
    %122 = vmatpush1.msra.mxu0 0.0
    %123 = vmatprep.subr.mxu0 0.0
    %124 = vmatpush1.msra.mxu0 0.0
    %125 = vmatprep.subr.mxu0 0.0
    %126 = vmatpush1.msra.mxu0 0.0
    %127 = vmatprep.subr.mxu0 0.0
    %128 = vmatpush1.msra.mxu0 0.0
    %129 = vmatprep.subr.mxu0 0.0
    %130 = vmatpush1.msra.mxu0 0.0
    %131 = vmatprep.subr.mxu0 0.0
    %132 = vmatpush1.msra.mxu0 0.0
    %133 = vmatprep.mubr.f32.mxu0 0.0
    %134 = vmatmul.mubr.f32.gmra.mrb[0].mxu0 %v64
    %v135 = vpop.f32.mrb[0].mxu0
    %v136 = vadd.f32 0.0, %v135
    %v137 = vpop.f32.mrb[0].mxu0
    %138 = vmatprep.mubr.f32.mxu0 0.0
    %139 = vmatmul.mubr.f32.gmra.mrb[0].mxu0 %v67
    %v140 = vpop.f32.mrb[0].mxu0
    %v141 = vadd.f32 0.0, %v140
    %v142 = vpop.f32.mrb[0].mxu0
    %143 = vdwg.mxu0
    %vm144 = vcmask 523264
    %v145 = vsel %vm144, %v136, -inf
    %v146 = vrot.slane %v145, 4
    %v147 = vmax.f32 %v145, %v146
    %v148 = vrot.slane %v147, 2
    %v149 = vmax.f32 %v147, %v148
    %v150 = vrot.slane %v149, 1
    %v151 = vmax.f32 %v149, %v150
    %v152 = vsel %vm144, %v141, -inf
    %v153 = vrot.slane %v152, 4
    %v154 = vmax.f32 %v152, %v153
    %v155 = vrot.slane %v154, 2
    %v156 = vmax.f32 %v154, %v155
    %v157 = vrot.slane %v156, 1
    %v158 = vmax.f32 %v156, %v157
    %v159 = vsub.f32 %v136, %v151
    %v160 = vsub.f32 %v141, %v158
    %v161 = vmul.f32 %v159, 1.442695
    %v162 = vpow.pop %v161
    %v163 = vmul.f32 %v160, 1.442695
    %v164 = vpow.pop %v163
    %v165 = vsel %vm144, %v162, 0.0
    %v166 = vrot.slane %v165, 4
    %v167 = vadd.f32 %v165, %v166
    %v168 = vrot.slane %v167, 2
    %v169 = vadd.f32 %v167, %v168
    %v170 = vrot.slane %v169, 1
    %v171 = vadd.f32 %v169, %v170
    %v172 = vsel %vm144, %v164, 0.0
    %v173 = vrot.slane %v172, 4
    %v174 = vadd.f32 %v172, %v173
    %v175 = vrot.slane %v174, 2
    %v176 = vadd.f32 %v174, %v175
    %v177 = vrot.slane %v176, 1
    %v178 = vadd.f32 %v176, %v177
    %v179 = vrcp.pop %v171
    %v180 = vrcp.pop %v178
    %v181 = vmul.f32 %v162, %v179
    %v182 = vmul.f32 %v164, %v180
    %v183 = vsel %vm144, %v181, 0.0
    %184 = vadd.xlane.f32.xlu0 %v183
    %v185 = vpop.xlane.xlu0 %184
    %v186 = vsel %vm144, %v182, 0.0
    %187 = vadd.xlane.f32.xlu0 %v186
    %v188 = vpop.xlane.xlu0 %187
    %v189 = vld [vmem:[#allocation7] sm:$0xff]
    %v190 = vld [vmem:[#allocation7 + $0x8] sm:$0xff]
    %v191 = vld [vmem:[#allocation7 + $0x10] sm:$0xff]
    %v192 = vld [vmem:[#allocation7 + $0x18] sm:$0xff]
    %v193 = vld [vmem:[#allocation7 + $0x20] sm:$0xff]
    %v194 = vld [vmem:[#allocation7 + $0x28] sm:$0xff]
    %v195 = vld [vmem:[#allocation7 + $0x30] sm:$0xff]
    %v196 = vld [vmem:[#allocation7 + $0x38] sm:$0xff]
    %v198 = vsel %vm144, %v181, 0
    %v201 = vsel %vm144, %v182, 0
    %203 = vmatprep.subr.mxu0 0.0
    %204 = vmatpush1.msra.mxu0 %v189
    %205 = vmatprep.subr.mxu0 0.0
    %206 = vmatpush1.msra.mxu0 %v190
    %207 = vmatprep.subr.mxu0 0.0
    %208 = vmatpush1.msra.mxu0 %v191
    %209 = vmatprep.subr.mxu0 0.0
    %210 = vmatpush1.msra.mxu0 %v192
    %211 = vmatprep.subr.mxu0 0.0
    %212 = vmatpush1.msra.mxu0 %v193
    %213 = vmatprep.subr.mxu0 0.0
    %214 = vmatpush1.msra.mxu0 %v194
    %215 = vmatprep.subr.mxu0 0.0
    %216 = vmatpush1.msra.mxu0 %v195
    %217 = vmatprep.subr.mxu0 0.0
    %218 = vmatpush1.msra.mxu0 %v196
    %219 = vmatprep.subr.mxu0 0.0
    %220 = vmatpush1.msra.mxu0 0.0
    %221 = vmatprep.subr.mxu0 0.0
    %222 = vmatpush1.msra.mxu0 0.0
    %223 = vmatprep.subr.mxu0 0.0
    %224 = vmatpush1.msra.mxu0 0.0
    %225 = vmatprep.subr.mxu0 0.0
    %226 = vmatpush1.msra.mxu0 0.0
    %227 = vmatprep.subr.mxu0 0.0
    %228 = vmatpush1.msra.mxu0 0.0
    %229 = vmatprep.subr.mxu0 0.0
    %230 = vmatpush1.msra.mxu0 0.0
    %231 = vmatprep.subr.mxu0 0.0
    %232 = vmatpush1.msra.mxu0 0.0
    %233 = vmatprep.subr.mxu0 0.0
    %234 = vmatpush1.msra.mxu0 0.0
    %235 = vmatprep.subr.mxu0 0.0
    %236 = vmatpush1.msra.mxu0 0.0
    %237 = vmatprep.subr.mxu0 0.0
    %238 = vmatpush1.msra.mxu0 0.0
    %239 = vmatprep.subr.mxu0 0.0
    %240 = vmatpush1.msra.mxu0 0.0
    %241 = vmatprep.subr.mxu0 0.0
    %242 = vmatpush1.msra.mxu0 0.0
    %243 = vmatprep.subr.mxu0 0.0
    %244 = vmatpush1.msra.mxu0 0.0
    %245 = vmatprep.subr.mxu0 0.0
    %246 = vmatpush1.msra.mxu0 0.0
    %247 = vmatprep.subr.mxu0 0.0
    %248 = vmatpush1.msra.mxu0 0.0
    %249 = vmatprep.subr.mxu0 0.0
    %250 = vmatpush1.msra.mxu0 0.0
    %251 = vmatprep.subr.mxu0 0.0
    %252 = vmatpush1.msra.mxu0 0.0
    %253 = vmatprep.subr.mxu0 0.0
    %254 = vmatpush1.msra.mxu0 0.0
    %255 = vmatprep.subr.mxu0 0.0
    %256 = vmatpush1.msra.mxu0 0.0
    %257 = vmatprep.subr.mxu0 0.0
    %258 = vmatpush1.msra.mxu0 0.0
    %259 = vmatprep.subr.mxu0 0.0
    %260 = vmatpush1.msra.mxu0 0.0
    %261 = vmatprep.subr.mxu0 0.0
    %262 = vmatpush1.msra.mxu0 0.0
    %263 = vmatprep.subr.mxu0 0.0
    %264 = vmatpush1.msra.mxu0 0.0
    %265 = vmatprep.subr.mxu0 0.0
    %266 = vmatpush1.msra.mxu0 0.0
    %267 = vmatprep.mubr.f32.mxu0 0.0
    %268 = vmatmul.mubr.f32.gmra.mrb[0].mxu0 %v198
    %v269 = vpop.f32.mrb[0].mxu0
    %v270 = vadd.f32 0.0, %v269
    %v271 = vpop.f32.mrb[0].mxu0
    %272 = vmatprep.mubr.f32.mxu0 0.0
    %273 = vmatmul.mubr.f32.gmra.mrb[0].mxu0 %v201
    %v274 = vpop.f32.mrb[0].mxu0
    %v275 = vadd.f32 0.0, %v274
    %v276 = vpop.f32.mrb[0].mxu0
    %277 = vdwg.mxu0
    %v278 = vrcp.pop %v185
    %v279 = vrcp.pop %v188
    %v280 = vmul.f32 %v270, %v278
    %v281 = vmul.f32 %v275, %v279
    %282 = vst [vmem:[#allocation8] sm:$0xff] %v280
    %283 = vst [vmem:[#allocation8 + $0x8] sm:$0xff] %v281
    // Predicated region
    $region26: #{tpu_custom_call.1} parent=1 // pred_check
      _
    $region27: #{tpu_custom_call.1} parent=1 // pred_check_branch
      %285 = sbr.rel (0) target = $region29
    $region28: #{tpu_custom_call.1} parent=1 // pred_region
      %s287 = ssub.s32 256, 256
      %288 = vsyncadd [#allocation4], %s287
      %s289 = sshll.u32 [#allocation8], 4
      %s290 = int_to_ptr.vmem [resolvable:$true] %s289
      %295 = dma.vmem_to_hbm [thread:$0]  %s290, 256, %s3, [#allocation4], 128, 128, 8
    $region29: #{tpu_custom_call.1} parent=1 // pred_fallthru
      _
    // Predicated region
    $region30: #{tpu_custom_call.1} parent=1 // pred_check
      _
    $region31: #{tpu_custom_call.1} parent=1 // pred_check_branch
      %297 = sbr.rel (0) target = $region33
    $region32: #{tpu_custom_call.1} parent=1 // pred_region
      %298 = dma.done [#allocation4], 256
    $region33: #{tpu_custom_call.1} parent=1 // pred_fallthru
      _
    %299 = vsyncpa [#allocation3], 1
    %300 = vsyncpa [#allocation6], 1
    %301 = vsyncpa [#allocation4], 1

</llo_original>
